<compile_context>
chip_gen: v7x
topology: tpu7x:2x2x1
jax: 0.10.0
libtpu: 0.0.40
codegen_flags: <defaults>
</compile_context>

<pallas_src>
import functools
import math

import jax
import jax.numpy as jnp
from jax.experimental import pallas as pl
from jax.experimental.pallas import tpu as pltpu

_LOG3 = math.log(3.0)
_INV_SQRT_2PI = 1.0 / math.sqrt(2.0 * math.pi)


def _anomaly_attention_kernel(jmi_ref, q_ref, k_ref, v_ref, sigma_ref,
                              *out_refs, scale, mask_flag, emit_attn):
    """Processes a (gb, tl) tile: gb (batch*head) slices, tl query rows."""
    if emit_attn:
        v_out_ref, series_ref, prior_ref, sigma_out_ref = out_refs
    else:
        (v_out_ref,) = out_refs

    q = q_ref[...] * scale              # (gb, tl, E)  -- scale folded into q
    k = k_ref[...]                      # (gb, S, E)
    v = v_ref[...]                      # (gb, S, D)
    jmi = jmi_ref[...]                  # (tl, S) float32, global (j - i)

    # scores[g, l, s] = sum_e q[g, l, e] * k[g, s, e]  (batched MXU matmul,
    # contraction on the last dims -> no explicit transpose of k).
    scores = jax.lax.dot_general(
        q, k, dimension_numbers=(((2,), (2,)), ((0,), (0,))),
        preferred_element_type=jnp.float32)                      # (gb, tl, S)

    if mask_flag:
        # TriangularCausalMask: mask where j > i. scale > 0, so masking the
        # scaled scores with -inf matches the reference mask-then-scale order.
        scores = jnp.where(jmi[None] > 0.0, -jnp.inf, scores)

    if emit_attn:
        # Prior / sigma computed and stored before the PV matmul so their
        # (rows, S) temporaries retire early (lower register pressure).
        sig = jax.nn.sigmoid(sigma_ref[...] * 5.0) + 1e-5        # (gb, tl, 1)
        sig = jnp.exp(sig * _LOG3) - 1.0                         # 3**sig - 1
        inv_sig = pl.reciprocal(sig, approx=False)               # (gb, tl, 1)
        neg_half_d2 = -0.5 * (jmi * jmi)                         # (tl, S)
        prior = (_INV_SQRT_2PI * inv_sig) * jnp.exp(
            neg_half_d2[None] * (inv_sig * inv_sig))             # (gb, tl, S)
        prior_ref[...] = prior.astype(prior_ref.dtype)
        sigma_out_ref[...] = sig.astype(sigma_out_ref.dtype)

    # Row softmax (attention_dropout = 0.0 -> identity dropout).
    m = jnp.max(scores, axis=-1, keepdims=True)
    e = jnp.exp(scores - m)
    denom = jnp.sum(e, axis=-1, keepdims=True)
    series = e * pl.reciprocal(denom, approx=False)              # (gb, tl, S)

    if emit_attn:
        series_ref[...] = series.astype(series_ref.dtype)

    # V[g, l, d] = sum_s series[g, l, s] * v[g, s, d]
    out = jax.lax.dot_general(
        series, v, dimension_numbers=(((2,), (1,)), ((0,), (0,))),
        preferred_element_type=jnp.float32)                      # (gb, tl, D)
    v_out_ref[...] = out.astype(v_out_ref.dtype)


def _choose_tiles(BH, L, S):
    """Pick (head-group size gb, query-row tile tl)."""
    # Row tile: keep each (tl, S) fp32 slab modest; tl must divide L and be a
    # multiple of 8 when tiling (fall back to full L otherwise).
    tl = L
    if L > 8:
        slab_budget = 128 * 1024                    # elements per (tl, S) slab
        for cand in (512, 256, 128, 64, 32, 16, 8):
            if cand < L and L % cand == 0 and cand * S <= slab_budget:
                tl = cand
                break
    # Group several (batch*head) slices per step when each one is tiny, to
    # amortize per-step overhead and widen stores.
    gb = 1
    for cand in (16, 8, 4, 2):
        if BH % cand == 0 and cand * tl * S <= 64 * 1024:
            gb = cand
            break
    return gb, tl


def anomaly_attention(queries, keys, values, sigma, *, mask_flag=True,
                      scale=None, output_attention=False):
    """Pallas implementation of AnomalyAttention.forward (attn_mask=None)."""
    B, L, H, E = queries.shape
    _, S, _, D = values.shape
    BH = B * H
    scale_val = float(scale) if scale is not None else 1.0 / math.sqrt(E)

    q = jnp.transpose(queries, (0, 2, 1, 3)).reshape(BH, L, E).astype(jnp.float32)
    k = jnp.transpose(keys, (0, 2, 1, 3)).reshape(BH, S, E).astype(jnp.float32)
    v = jnp.transpose(values, (0, 2, 1, 3)).reshape(BH, S, D).astype(jnp.float32)
    sg = jnp.transpose(sigma, (0, 2, 1)).reshape(BH, L, 1).astype(jnp.float32)

    # (j - i) table shared across all (batch, head) slices; precomputed once
    # so the kernel doesn't rebuild iotas / distances every grid step.
    jmi = (jnp.arange(S, dtype=jnp.float32)[None, :]
           - jnp.arange(L, dtype=jnp.float32)[:, None])          # (L, S)

    gb, tl = _choose_tiles(BH, L, S)
    grid = (BH // gb, L // tl)
    emit_attn = bool(output_attention)

    kernel = functools.partial(_anomaly_attention_kernel, scale=scale_val,
                               mask_flag=mask_flag, emit_attn=emit_attn)

    in_specs = [
        pl.BlockSpec((tl, S), lambda bi, li: (li, 0)),            # j - i
        pl.BlockSpec((gb, tl, E), lambda bi, li: (bi, li, 0)),    # q
        pl.BlockSpec((gb, S, E), lambda bi, li: (bi, 0, 0)),      # k
        pl.BlockSpec((gb, S, D), lambda bi, li: (bi, 0, 0)),      # v
        pl.BlockSpec((gb, tl, 1), lambda bi, li: (bi, li, 0)),    # sigma
    ]
    v_spec = pl.BlockSpec((gb, tl, D), lambda bi, li: (bi, li, 0))
    ls_spec = pl.BlockSpec((gb, tl, S), lambda bi, li: (bi, li, 0))
    s1_spec = pl.BlockSpec((gb, tl, 1), lambda bi, li: (bi, li, 0))

    if emit_attn:
        out_shape = (
            jax.ShapeDtypeStruct((BH, L, D), jnp.float32),   # V
            jax.ShapeDtypeStruct((BH, L, S), jnp.float32),   # series
            jax.ShapeDtypeStruct((BH, L, S), jnp.float32),   # prior
            jax.ShapeDtypeStruct((BH, L, 1), jnp.float32),   # sigma (narrow)
        )
        out_specs = (v_spec, ls_spec, ls_spec, s1_spec)
    else:
        out_shape = jax.ShapeDtypeStruct((BH, L, D), jnp.float32)
        out_specs = v_spec

    # Explicit VMEM budget with headroom (double-buffered blocks), clamped so
    # the same config stays within v7x's 64 MiB physical VMEM.
    elt = 4
    blk_in = (tl * S + gb * (tl * E + S * E + S * D + tl)) * elt
    blk_out = gb * tl * D * elt
    if emit_attn:
        blk_out += gb * (2 * tl * S + tl) * elt
    vmem_limit = int(min(max(6 * (blk_in + blk_out), 32 * 1024 * 1024),
                         48 * 1024 * 1024))

    outs = pl.pallas_call(
        kernel,
        out_shape=out_shape,
        grid=grid,
        in_specs=in_specs,
        out_specs=out_specs,
        compiler_params=pltpu.CompilerParams(
            dimension_semantics=("parallel", "parallel"),
            vmem_limit_bytes=vmem_limit),
    )(jmi, q, k, v, sg)

    if emit_attn:
        v_out, series, prior, sig_out = outs
    else:
        v_out = outs

    # (BH, L, D) -> (B, L, H, D); matches V.contiguous() in the reference.
    # (Writing V directly in (B, L, H, D) layout would need an 8-aligned H
    #  block, so the transpose is left to XLA.)
    V = jnp.transpose(v_out.reshape(B, H, L, D), (0, 2, 1, 3))

    if emit_attn:
        series = series.reshape(B, H, L, S)
        prior = prior.reshape(B, H, L, S)
        sig_full = jnp.broadcast_to(sig_out.reshape(B, H, L, 1), (B, H, L, S))
        return V, series, prior, sig_full
    return V, None


def _reference(queries, keys, values, sigma, *, mask_flag=True, scale=None):
    """Plain-JAX port of the PyTorch forward for numerical validation."""
    B, L, H, E = queries.shape
    scale_val = scale if scale is not None else 1.0 / math.sqrt(E)
    scores = jnp.einsum('blhe,bshe->bhls', queries, keys)
    if mask_flag:
        causal = jnp.triu(jnp.ones((L, L), dtype=bool), k=1)
        scores = jnp.where(causal[None, None], -jnp.inf, scores)
    attn = scale_val * scores
    sig = jnp.transpose(sigma, (0, 2, 1))
    sig = jax.nn.sigmoid(sig * 5.0) + 1e-5
    sig = jnp.power(3.0, sig) - 1.0
    sig = jnp.repeat(sig[..., None], L, axis=-1)
    dist = jnp.abs(jnp.arange(L)[:, None] - jnp.arange(L)[None, :]).astype(jnp.float32)
    prior = (1.0 / (math.sqrt(2.0 * math.pi) * sig)
             * jnp.exp(-dist ** 2 / 2.0 / sig ** 2))
    series = jax.nn.softmax(attn, axis=-1)
    V = jnp.einsum('bhls,bshd->blhd', series, values)
    return V, series, prior, sig


def _check_case(key, B, L, H, E):
    D = E
    kq, kk, kv, ks = jax.random.split(key, 4)
    queries = jax.random.normal(kq, (B, L, H, E), dtype=jnp.float32)
    keys = jax.random.normal(kk, (B, L, H, E), dtype=jnp.float32)
    values = jax.random.normal(kv, (B, L, H, D), dtype=jnp.float32)
    sigma = jax.random.normal(ks, (B, L, H), dtype=jnp.float32)

    V, series, prior, sig = anomaly_attention(
        queries, keys, values, sigma, mask_flag=True, output_attention=True)
    jax.block_until_ready((V, series, prior, sig))

    V_ref, series_ref, prior_ref, sig_ref = _reference(
        queries, keys, values, sigma, mask_flag=True)

    assert jnp.allclose(V, V_ref, rtol=1e-5, atol=1e-5)
    assert jnp.allclose(series, series_ref, rtol=1e-5, atol=1e-5)
    assert jnp.allclose(prior, prior_ref, rtol=1e-5, atol=1e-5)
    assert jnp.allclose(sig, sig_ref, rtol=1e-5, atol=1e-5)

    # Default module path (output_attention=False) returns (V, None) and only
    # writes the V output.
    V_only, none_attn = anomaly_attention(queries, keys, values, sigma)
    jax.block_until_ready(V_only)
    assert none_attn is None
    assert jnp.allclose(V_only, V_ref, rtol=1e-5, atol=1e-5)


if __name__ == "__main__":
    root = jax.random.PRNGKey(0)
    k0, k1 = jax.random.split(root, 2)
    # Small shapes consistent with the module: win_size = L = S.
    _check_case(k0, B=2, L=8, H=2, E=32)     # single-tile, grouped heads path
    _check_case(k1, B=1, L=32, H=2, E=16)    # exercises the L row-tiling path
    print("KERNEL_OK")
</pallas_src>

<mosaic_0001>
module attributes {stable_mosaic.version = 11 : i64} {
  func.func @_anomaly_attention_kernel(%arg0: i32, %arg1: i32, %arg2: memref<8x8xf32, #tpu.memory_space<vmem>>, %arg3: memref<4x8x32xf32, #tpu.memory_space<vmem>>, %arg4: memref<4x8x32xf32, #tpu.memory_space<vmem>>, %arg5: memref<4x8x32xf32, #tpu.memory_space<vmem>>, %arg6: memref<4x8x1xf32, #tpu.memory_space<vmem>>, %arg7: memref<4x8x32xf32, #tpu.memory_space<vmem>>, %arg8: memref<4x8x8xf32, #tpu.memory_space<vmem>>, %arg9: memref<4x8x8xf32, #tpu.memory_space<vmem>>, %arg10: memref<4x8x1xf32, #tpu.memory_space<vmem>>) attributes {dimension_semantics = [#tpu.dimension_semantics<parallel>, #tpu.dimension_semantics<parallel>], iteration_bounds = array<i64: 1, 1>, scalar_prefetch = 0 : i64, scratch_operands = 0 : i64, tpu.core_type = #tpu.core_type<tc>, window_params = [{transform_indices = @transform_0, window_bounds = array<i64: 8, 8>}, {transform_indices = @transform_1, window_bounds = array<i64: 4, 8, 32>}, {transform_indices = @transform_2, window_bounds = array<i64: 4, 8, 32>}, {transform_indices = @transform_3, window_bounds = array<i64: 4, 8, 32>}, {transform_indices = @transform_4, window_bounds = array<i64: 4, 8, 1>}, {transform_indices = @transform_5, window_bounds = array<i64: 4, 8, 32>}, {transform_indices = @transform_6, window_bounds = array<i64: 4, 8, 8>}, {transform_indices = @transform_7, window_bounds = array<i64: 4, 8, 8>}, {transform_indices = @transform_8, window_bounds = array<i64: 4, 8, 1>}]} {
    %c0 = arith.constant 0 : index
    %c0_0 = arith.constant 0 : index
    %c0_1 = arith.constant 0 : index
    %0 = vector.load %arg3[%c0, %c0_0, %c0_1] : memref<4x8x32xf32, #tpu.memory_space<vmem>>, vector<4x8x32xf32>
    %cst = arith.constant 0.176776692 : f32
    %1 = vector.broadcast %cst : f32 to vector<4x8x32xf32>
    %2 = arith.mulf %0, %1 : vector<4x8x32xf32>
    %c0_2 = arith.constant 0 : index
    %c0_3 = arith.constant 0 : index
    %c0_4 = arith.constant 0 : index
    %3 = vector.load %arg4[%c0_2, %c0_3, %c0_4] : memref<4x8x32xf32, #tpu.memory_space<vmem>>, vector<4x8x32xf32>
    %c0_5 = arith.constant 0 : index
    %c0_6 = arith.constant 0 : index
    %c0_7 = arith.constant 0 : index
    %4 = vector.load %arg5[%c0_5, %c0_6, %c0_7] : memref<4x8x32xf32, #tpu.memory_space<vmem>>, vector<4x8x32xf32>
    %c0_8 = arith.constant 0 : index
    %c0_9 = arith.constant 0 : index
    %5 = vector.load %arg2[%c0_8, %c0_9] : memref<8x8xf32, #tpu.memory_space<vmem>>, vector<8x8xf32>
    %cst_10 = arith.constant dense<0.000000e+00> : vector<4x8x8xf32>
    %6 = tpu.matmul %2, %3, %cst_10 {dimension_numbers = #tpu.dot_dimension_numbers<[2], [2], [1], [1], [0, 0, 0, 1, 1, 1], [0], [0]>} : vector<4x8x32xf32>, vector<4x8x32xf32>, vector<4x8x8xf32> -> vector<4x8x8xf32>
    %7 = vector.shape_cast %5 : vector<8x8xf32> to vector<1x8x8xf32>
    %cst_11 = arith.constant 0.000000e+00 : f32
    %8 = vector.broadcast %cst_11 : f32 to vector<1x8x8xf32>
    %9 = arith.cmpf ogt, %7, %8 : vector<1x8x8xf32>
    %cst_12 = arith.constant 0xFF800000 : f32
    %10 = vector.shape_cast %9 : vector<1x8x8xi1> to vector<1x8x8xi1>
    %11 = vector.broadcast %10 : vector<1x8x8xi1> to vector<4x8x8xi1>
    %12 = vector.broadcast %cst_12 : f32 to vector<4x8x8xf32>
    %13 = arith.select %11, %12, %6 : vector<4x8x8xi1>, vector<4x8x8xf32>
    %c0_13 = arith.constant 0 : index
    %c0_14 = arith.constant 0 : index
    %c0_15 = arith.constant 0 : index
    %14 = vector.load %arg6[%c0_13, %c0_14, %c0_15] : memref<4x8x1xf32, #tpu.memory_space<vmem>>, vector<4x8x1xf32>
    %cst_16 = arith.constant 5.000000e+00 : f32
    %15 = vector.broadcast %cst_16 : f32 to vector<4x8x1xf32>
    %16 = arith.mulf %14, %15 : vector<4x8x1xf32>
    %17 = arith.negf %16 : vector<4x8x1xf32>
    %18 = math.exp %17 : vector<4x8x1xf32>
    %cst_17 = arith.constant 1.000000e+00 : f32
    %19 = vector.broadcast %cst_17 : f32 to vector<4x8x1xf32>
    %20 = arith.addf %19, %18 : vector<4x8x1xf32>
    %21 = arith.divf %19, %20 : vector<4x8x1xf32>
    %cst_18 = arith.constant 9.99999974E-6 : f32
    %22 = vector.broadcast %cst_18 : f32 to vector<4x8x1xf32>
    %23 = arith.addf %21, %22 : vector<4x8x1xf32>
    %cst_19 = arith.constant 1.09861231 : f32
    %24 = vector.broadcast %cst_19 : f32 to vector<4x8x1xf32>
    %25 = arith.mulf %23, %24 : vector<4x8x1xf32>
    %26 = math.exp %25 : vector<4x8x1xf32>
    %cst_20 = arith.constant 1.000000e+00 : f32
    %27 = vector.broadcast %cst_20 : f32 to vector<4x8x1xf32>
    %28 = arith.subf %26, %27 : vector<4x8x1xf32>
    %29 = tpu.reciprocal %28 : vector<4x8x1xf32> -> vector<4x8x1xf32>
    %30 = arith.mulf %5, %5 : vector<8x8xf32>
    %cst_21 = arith.constant -5.000000e-01 : f32
    %31 = vector.broadcast %cst_21 : f32 to vector<8x8xf32>
    %32 = arith.mulf %31, %30 : vector<8x8xf32>
    %cst_22 = arith.constant 0.398942292 : f32
    %33 = vector.broadcast %cst_22 : f32 to vector<4x8x1xf32>
    %34 = arith.mulf %33, %29 : vector<4x8x1xf32>
    %35 = vector.shape_cast %32 : vector<8x8xf32> to vector<1x8x8xf32>
    %36 = arith.mulf %29, %29 : vector<4x8x1xf32>
    %37 = vector.broadcast %35 : vector<1x8x8xf32> to vector<4x8x8xf32>
    %38 = vector.broadcast %36 : vector<4x8x1xf32> to vector<4x8x8xf32>
    %39 = arith.mulf %37, %38 : vector<4x8x8xf32>
    %40 = math.exp %39 : vector<4x8x8xf32>
    %41 = vector.broadcast %34 : vector<4x8x1xf32> to vector<4x8x8xf32>
    %42 = arith.mulf %41, %40 : vector<4x8x8xf32>
    %c0_23 = arith.constant 0 : index
    %c0_24 = arith.constant 0 : index
    %c0_25 = arith.constant 0 : index
    %43 = vector.load %arg9[%c0_23, %c0_24, %c0_25] : memref<4x8x8xf32, #tpu.memory_space<vmem>>, vector<4x8x8xf32>
    tpu.vector_store %arg9[%c0_23, %c0_24, %c0_25], %42 {strides = array<i32>} : memref<4x8x8xf32, #tpu.memory_space<vmem>>, vector<4x8x8xf32>,
    %c0_26 = arith.constant 0 : index
    %c0_27 = arith.constant 0 : index
    %c0_28 = arith.constant 0 : index
    %44 = vector.load %arg10[%c0_26, %c0_27, %c0_28] : memref<4x8x1xf32, #tpu.memory_space<vmem>>, vector<4x8x1xf32>
    tpu.vector_store %arg10[%c0_26, %c0_27, %c0_28], %28 {strides = array<i32>} : memref<4x8x1xf32, #tpu.memory_space<vmem>>, vector<4x8x1xf32>,
    %cst_29 = arith.constant dense<0xFF800000> : vector<4x8xf32>
    %45 = vector.multi_reduction <maximumf>, %13, %cst_29 [2] : vector<4x8x8xf32> to vector<4x8xf32>
    %46 = vector.shape_cast %45 : vector<4x8xf32> to vector<4x8x1xf32>
    %47 = vector.broadcast %46 : vector<4x8x1xf32> to vector<4x8x8xf32>
    %48 = arith.subf %13, %47 : vector<4x8x8xf32>
    %49 = math.exp %48 : vector<4x8x8xf32>
    %cst_30 = arith.constant dense<0.000000e+00> : vector<4x8xf32>
    %50 = vector.multi_reduction <add>, %49, %cst_30 [2] : vector<4x8x8xf32> to vector<4x8xf32>
    %51 = vector.shape_cast %50 : vector<4x8xf32> to vector<4x8x1xf32>
    %52 = tpu.reciprocal %51 : vector<4x8x1xf32> -> vector<4x8x1xf32>
    %53 = vector.broadcast %52 : vector<4x8x1xf32> to vector<4x8x8xf32>
    %54 = arith.mulf %49, %53 : vector<4x8x8xf32>
    %c0_31 = arith.constant 0 : index
    %c0_32 = arith.constant 0 : index
    %c0_33 = arith.constant 0 : index
    %55 = vector.load %arg8[%c0_31, %c0_32, %c0_33] : memref<4x8x8xf32, #tpu.memory_space<vmem>>, vector<4x8x8xf32>
    tpu.vector_store %arg8[%c0_31, %c0_32, %c0_33], %54 {strides = array<i32>} : memref<4x8x8xf32, #tpu.memory_space<vmem>>, vector<4x8x8xf32>,
    %cst_34 = arith.constant dense<0.000000e+00> : vector<4x8x32xf32>
    %56 = tpu.matmul %54, %4, %cst_34 {dimension_numbers = #tpu.dot_dimension_numbers<[2], [1], [1], [2], [0, 0, 0, 1, 1, 2], [0], [0]>} : vector<4x8x8xf32>, vector<4x8x32xf32>, vector<4x8x32xf32> -> vector<4x8x32xf32>
    %c0_35 = arith.constant 0 : index
    %c0_36 = arith.constant 0 : index
    %c0_37 = arith.constant 0 : index
    %57 = vector.load %arg7[%c0_35, %c0_36, %c0_37] : memref<4x8x32xf32, #tpu.memory_space<vmem>>, vector<4x8x32xf32>
    tpu.vector_store %arg7[%c0_35, %c0_36, %c0_37], %56 {strides = array<i32>} : memref<4x8x32xf32, #tpu.memory_space<vmem>>, vector<4x8x32xf32>,
    return
  }
  func.func @transform_0(%arg0: i32, %arg1: i32) -> (i32, i32) {
    %c0_i32 = arith.constant 0 : i32
    %c0_i32_0 = arith.constant 0 : i32
    return %arg1, %c0_i32 : i32, i32
  }
  func.func @transform_1(%arg0: i32, %arg1: i32) -> (i32, i32, i32) {
    %c0_i32 = arith.constant 0 : i32
    %c0_i32_0 = arith.constant 0 : i32
    return %arg0, %arg1, %c0_i32 : i32, i32, i32
  }
  func.func @transform_2(%arg0: i32, %arg1: i32) -> (i32, i32, i32) {
    %c0_i32 = arith.constant 0 : i32
    %c0_i32_0 = arith.constant 0 : i32
    %c0_i32_1 = arith.constant 0 : i32
    return %arg0, %c0_i32, %c0_i32_0 : i32, i32, i32
  }
  func.func @transform_3(%arg0: i32, %arg1: i32) -> (i32, i32, i32) {
    %c0_i32 = arith.constant 0 : i32
    %c0_i32_0 = arith.constant 0 : i32
    %c0_i32_1 = arith.constant 0 : i32
    return %arg0, %c0_i32, %c0_i32_0 : i32, i32, i32
  }
  func.func @transform_4(%arg0: i32, %arg1: i32) -> (i32, i32, i32) {
    %c0_i32 = arith.constant 0 : i32
    %c0_i32_0 = arith.constant 0 : i32
    return %arg0, %arg1, %c0_i32 : i32, i32, i32
  }
  func.func @transform_5(%arg0: i32, %arg1: i32) -> (i32, i32, i32) {
    %c0_i32 = arith.constant 0 : i32
    %c0_i32_0 = arith.constant 0 : i32
    return %arg0, %arg1, %c0_i32 : i32, i32, i32
  }
  func.func @transform_6(%arg0: i32, %arg1: i32) -> (i32, i32, i32) {
    %c0_i32 = arith.constant 0 : i32
    %c0_i32_0 = arith.constant 0 : i32
    return %arg0, %arg1, %c0_i32 : i32, i32, i32
  }
  func.func @transform_7(%arg0: i32, %arg1: i32) -> (i32, i32, i32) {
    %c0_i32 = arith.constant 0 : i32
    %c0_i32_0 = arith.constant 0 : i32
    return %arg0, %arg1, %c0_i32 : i32, i32, i32
  }
  func.func @transform_8(%arg0: i32, %arg1: i32) -> (i32, i32, i32) {
    %c0_i32 = arith.constant 0 : i32
    %c0_i32_0 = arith.constant 0 : i32
    return %arg0, %arg1, %c0_i32 : i32, i32, i32
  }
}

</mosaic_0001>

<llo_original>
// kernel: tpu_custom_call.1
$region0: #{tpu_custom_call.1}
  #allocation0 [shape = 'u32[]', space=smem, size = 0x4, offset = 0x4, fixed_abs, tag = 'smem constant byte address 0x4 - core index']
  #allocation1 [shape = 'u32[144,128]{1,0:T(1,128)}', space=vmem, size = 0x12000, scoped, tag = 'internal scratch']
  %s0 = inlined_call_operand.hbm [shape: f32[8,8], index: 0, kind: input, shape index: {}]
  %s1 = inlined_call_operand.vmem [shape: f32[4,8,32], index: 1, kind: input, shape index: {}]
  %s2 = inlined_call_operand.hbm [shape: f32[4,8,32], index: 2, kind: input, shape index: {}]
  %s3 = inlined_call_operand.hbm [shape: f32[4,8,32], index: 3, kind: input, shape index: {}]
  %s4 = inlined_call_operand.vmem [shape: f32[4,8,1], index: 4, kind: input, shape index: {}]
  %s5 = inlined_call_operand.hbm [shape: f32[4,8,32], index: 5, kind: output, shape index: {0}]
  %s6 = inlined_call_operand.hbm [shape: f32[4,8,8], index: 6, kind: output, shape index: {1}]
  %s7 = inlined_call_operand.hbm [shape: f32[4,8,8], index: 7, kind: output, shape index: {2}]
  %s8 = inlined_call_operand.vmem [shape: f32[4,8,1], index: 8, kind: output, shape index: {3}]
  %9 = xla_tuple %s5, %s6, %s7, %s8
  %s10 = sld [smem:[#allocation0]]
  $region66: #{tpu_custom_call.1} parent=0
    _
  %s12 = ssub.s32 1, %s10
  %s13 = scalar_select 0, %s12, %s10
  $region1: #{tpu_custom_call.1} parent=0
    #allocation2 [shape = 'u8[4096]{0}', space=vmem, size = 0x1000, scoped, tag = 'input window, operand 0, single buffered']
    #allocation3 [shape = 's32[1]{0}', space=sflag, size = 0x4, scoped, tag = 'scoped memory for tpu_custom_call.1']
    #allocation4 [shape = 's32[1]{0}', space=sflag, size = 0x4, scoped, tag = 'scoped memory for tpu_custom_call.1']
    #allocation5 [shape = 'u8[16384]{0}', space=vmem, size = 0x4000, scoped, tag = 'input window, operand 2, single buffered']
    #allocation6 [shape = 's32[1]{0}', space=sflag, size = 0x4, scoped, tag = 'scoped memory for tpu_custom_call.1']
    #allocation7 [shape = 'u8[16384]{0}', space=vmem, size = 0x4000, scoped, tag = 'input window, operand 3, single buffered']
    #allocation8 [shape = 'u8[16384]{0}', space=vmem, size = 0x4000, scoped, tag = 'output window, operand 0, single buffered']
    #allocation9 [shape = 'u8[16384]{0}', space=vmem, size = 0x4000, scoped, tag = 'output window, operand 1, single buffered']
    #allocation10 [shape = 's32[1]{0}', space=sflag, size = 0x4, scoped, tag = 'scoped memory for tpu_custom_call.1']
    #allocation11 [shape = 'u8[16384]{0}', space=vmem, size = 0x4000, scoped, tag = 'output window, operand 2, single buffered']
    %14 = vsyncpa [#allocation3], 0
    %15 = vsyncpa [#allocation6], 0
    %16 = vsyncpa [#allocation4], 0
    %17 = vsyncpa [#allocation10], 0
    // Predicated region
    $region2: #{tpu_custom_call.1} parent=1 // pred_check
      _
    $region3: #{tpu_custom_call.1} parent=1 // pred_check_branch
      %19 = sbr.rel (0) target = $region5
    $region4: #{tpu_custom_call.1} parent=1 // pred_region
      %s21 = ssub.s32 128, 128
      %22 = vsyncadd [#allocation3], %s21
      %s24 = sshll.u32 [#allocation2], 4
      %s25 = int_to_ptr.vmem [resolvable:$true] %s24
      %27 = dma.hbm_to_vmem [thread:$0]  %s0, 128, %s25, [#allocation3]
    $region5: #{tpu_custom_call.1} parent=1 // pred_fallthru
      _
    // Predicated region
    $region6: #{tpu_custom_call.1} parent=1 // pred_check
      _
    $region7: #{tpu_custom_call.1} parent=1 // pred_check_branch
      %29 = sbr.rel (0) target = $region9
    $region8: #{tpu_custom_call.1} parent=1 // pred_region
      _
    $region9: #{tpu_custom_call.1} parent=1 // pred_fallthru
      _
    // Predicated region
    $region10: #{tpu_custom_call.1} parent=1 // pred_check
      _
    $region11: #{tpu_custom_call.1} parent=1 // pred_check_branch
      %31 = sbr.rel (0) target = $region13
    $region12: #{tpu_custom_call.1} parent=1 // pred_region
      %s33 = ssub.s32 512, 512
      %34 = vsyncadd [#allocation6], %s33
      %s35 = sshll.u32 [#allocation5], 4
      %s36 = int_to_ptr.vmem [resolvable:$true] %s35
      %41 = dma.hbm_to_vmem [thread:$0]  %s2, 512, %s36, [#allocation6], 128, 128, 8
    $region13: #{tpu_custom_call.1} parent=1 // pred_fallthru
      _
    // Predicated region
    $region14: #{tpu_custom_call.1} parent=1 // pred_check
      _
    $region15: #{tpu_custom_call.1} parent=1 // pred_check_branch
      %43 = sbr.rel (0) target = $region17
    $region16: #{tpu_custom_call.1} parent=1 // pred_region
      %s45 = ssub.s32 512, 512
      %46 = vsyncadd [#allocation6], %s45
      %s47 = sshll.u32 [#allocation7], 4
      %s48 = int_to_ptr.vmem [resolvable:$true] %s47
      %53 = dma.hbm_to_vmem [thread:$0]  %s3, 512, %s48, [#allocation6], 128, 128, 8
    $region17: #{tpu_custom_call.1} parent=1 // pred_fallthru
      _
    // Predicated region
    $region18: #{tpu_custom_call.1} parent=1 // pred_check
      _
    $region19: #{tpu_custom_call.1} parent=1 // pred_check_branch
      %55 = sbr.rel (0) target = $region21
    $region20: #{tpu_custom_call.1} parent=1 // pred_region
      _
    $region21: #{tpu_custom_call.1} parent=1 // pred_fallthru
      _
    // Predicated region
    $region22: #{tpu_custom_call.1} parent=1 // pred_check
      _
    $region23: #{tpu_custom_call.1} parent=1 // pred_check_branch
      %57 = sbr.rel (0) target = $region25
    $region24: #{tpu_custom_call.1} parent=1 // pred_region
      %58 = dma.done [#allocation3], 128
    $region25: #{tpu_custom_call.1} parent=1 // pred_fallthru
      _
    // Predicated region
    $region26: #{tpu_custom_call.1} parent=1 // pred_check
      _
    $region27: #{tpu_custom_call.1} parent=1 // pred_check_branch
      %60 = sbr.rel (0) target = $region29
    $region28: #{tpu_custom_call.1} parent=1 // pred_region
      %61 = dma.done [#allocation6], 512
    $region29: #{tpu_custom_call.1} parent=1 // pred_fallthru
      _
    // Predicated region
    $region30: #{tpu_custom_call.1} parent=1 // pred_check
      _
    $region31: #{tpu_custom_call.1} parent=1 // pred_check_branch
      %63 = sbr.rel (0) target = $region33
    $region32: #{tpu_custom_call.1} parent=1 // pred_region
      %64 = dma.done [#allocation6], 512
    $region33: #{tpu_custom_call.1} parent=1 // pred_fallthru
      _
    %v65 = vld [vmem:[%s1] sm:$0xff]
    %v66 = vld [vmem:[%s1 + $0x8] sm:$0xff]
    %v67 = vld [vmem:[%s1 + $0x10] sm:$0xff]
    %v68 = vld [vmem:[%s1 + $0x18] sm:$0xff]
    %v69 = vmul.f32 %v65, 0.17677669
    %v70 = vmul.f32 %v66, 0.17677669
    %v71 = vmul.f32 %v67, 0.17677669
    %v72 = vmul.f32 %v68, 0.17677669
    %v73 = vld [vmem:[#allocation5] sm:$0xff]
    %v74 = vld [vmem:[#allocation5 + $0x8] sm:$0xff]
    %v75 = vld [vmem:[#allocation5 + $0x10] sm:$0xff]
    %v76 = vld [vmem:[#allocation5 + $0x18] sm:$0xff]
    %v77 = vld [vmem:[#allocation7] sm:$0xff]
    %v78 = vld [vmem:[#allocation7 + $0x8] sm:$0xff]
    %v79 = vld [vmem:[#allocation7 + $0x10] sm:$0xff]
    %v80 = vld [vmem:[#allocation7 + $0x18] sm:$0xff]
    %v81 = vld [vmem:[#allocation2] sm:$0xff]
    %vm82 = vcmask 261120
    %v84 = vsel %vm82, %v69, 0
    %v87 = vsel %vm82, %v73, 0
    %89 = vmatprep.subr.mxu0 0.0
    %90 = vmatpush1.xpose.msra.mxu0 %v87
    %91 = vmatprep.subr.mxu0 0.0
    %92 = vmatpush1.xpose.msra.mxu0 0.0
    %93 = vmatprep.subr.mxu0 0.0
    %94 = vmatpush1.xpose.msra.mxu0 0.0
    %95 = vmatprep.subr.mxu0 0.0
    %96 = vmatpush1.xpose.msra.mxu0 0.0
    %97 = vmatprep.subr.mxu0 0.0
    %98 = vmatpush1.xpose.msra.mxu0 0.0
    %99 = vmatprep.subr.mxu0 0.0
    %100 = vmatpush1.xpose.msra.mxu0 0.0
    %101 = vmatprep.subr.mxu0 0.0
    %102 = vmatpush1.xpose.msra.mxu0 0.0
    %103 = vmatprep.subr.mxu0 0.0
    %104 = vmatpush1.xpose.msra.mxu0 0.0
    %105 = vmatprep.subr.mxu0 0.0
    %106 = vmatpush1.xpose.msra.mxu0 0.0
    %107 = vmatprep.subr.mxu0 0.0
    %108 = vmatpush1.xpose.msra.mxu0 0.0
    %109 = vmatprep.subr.mxu0 0.0
    %110 = vmatpush1.xpose.msra.mxu0 0.0
    %111 = vmatprep.subr.mxu0 0.0
    %112 = vmatpush1.xpose.msra.mxu0 0.0
    %113 = vmatprep.subr.mxu0 0.0
    %114 = vmatpush1.xpose.msra.mxu0 0.0
    %115 = vmatprep.subr.mxu0 0.0
    %116 = vmatpush1.xpose.msra.mxu0 0.0
    %117 = vmatprep.subr.mxu0 0.0
    %118 = vmatpush1.xpose.msra.mxu0 0.0
    %119 = vmatprep.subr.mxu0 0.0
    %120 = vmatpush1.xpose.msra.mxu0 0.0
    %121 = vmatprep.subr.mxu0 0.0
    %122 = vmatpush1.xpose.msra.mxu0 0.0
    %123 = vmatprep.subr.mxu0 0.0
    %124 = vmatpush1.xpose.msra.mxu0 0.0
    %125 = vmatprep.subr.mxu0 0.0
    %126 = vmatpush1.xpose.msra.mxu0 0.0
    %127 = vmatprep.subr.mxu0 0.0
    %128 = vmatpush1.xpose.msra.mxu0 0.0
    %129 = vmatprep.subr.mxu0 0.0
    %130 = vmatpush1.xpose.msra.mxu0 0.0
    %131 = vmatprep.subr.mxu0 0.0
    %132 = vmatpush1.xpose.msra.mxu0 0.0
    %133 = vmatprep.subr.mxu0 0.0
    %134 = vmatpush1.xpose.msra.mxu0 0.0
    %135 = vmatprep.subr.mxu0 0.0
    %136 = vmatpush1.xpose.msra.mxu0 0.0
    %137 = vmatprep.subr.mxu0 0.0
    %138 = vmatpush1.xpose.msra.mxu0 0.0
    %139 = vmatprep.subr.mxu0 0.0
    %140 = vmatpush1.xpose.msra.mxu0 0.0
    %141 = vmatprep.subr.mxu0 0.0
    %142 = vmatpush1.xpose.msra.mxu0 0.0
    %143 = vmatprep.subr.mxu0 0.0
    %144 = vmatpush1.xpose.msra.mxu0 0.0
    %145 = vmatprep.subr.mxu0 0.0
    %146 = vmatpush1.xpose.msra.mxu0 0.0
    %147 = vmatprep.subr.mxu0 0.0
    %148 = vmatpush1.xpose.msra.mxu0 0.0
    %149 = vmatprep.subr.mxu0 0.0
    %150 = vmatpush1.xpose.msra.mxu0 0.0
    %151 = vmatprep.subr.mxu0 0.0
    %152 = vmatpush1.xpose.msra.mxu0 0.0
    %153 = vmatprep.mubr.f32.mxu0 0.0
    %154 = vmatmul.mubr.f32.gmra.mrb[0].mxu0 %v84
    %v155 = vpop.f32.mrb[0].mxu0
    %v156 = vadd.f32 0.0, %v155
    %v157 = vpop.f32.mrb[0].mxu0
    %158 = vdwg.mxu0
    %v160 = vsel %vm82, %v70, 0
    %v163 = vsel %vm82, %v74, 0
    %165 = vmatprep.subr.mxu0 0.0
    %166 = vmatpush1.xpose.msra.mxu0 %v163
    %167 = vmatprep.subr.mxu0 0.0
    %168 = vmatpush1.xpose.msra.mxu0 0.0
    %169 = vmatprep.subr.mxu0 0.0
    %170 = vmatpush1.xpose.msra.mxu0 0.0
    %171 = vmatprep.subr.mxu0 0.0
    %172 = vmatpush1.xpose.msra.mxu0 0.0
    %173 = vmatprep.subr.mxu0 0.0
    %174 = vmatpush1.xpose.msra.mxu0 0.0
    %175 = vmatprep.subr.mxu0 0.0
    %176 = vmatpush1.xpose.msra.mxu0 0.0
    %177 = vmatprep.subr.mxu0 0.0
    %178 = vmatpush1.xpose.msra.mxu0 0.0
    %179 = vmatprep.subr.mxu0 0.0
    %180 = vmatpush1.xpose.msra.mxu0 0.0
    %181 = vmatprep.subr.mxu0 0.0
    %182 = vmatpush1.xpose.msra.mxu0 0.0
    %183 = vmatprep.subr.mxu0 0.0
    %184 = vmatpush1.xpose.msra.mxu0 0.0
    %185 = vmatprep.subr.mxu0 0.0
    %186 = vmatpush1.xpose.msra.mxu0 0.0
    %187 = vmatprep.subr.mxu0 0.0
    %188 = vmatpush1.xpose.msra.mxu0 0.0
    %189 = vmatprep.subr.mxu0 0.0
    %190 = vmatpush1.xpose.msra.mxu0 0.0
    %191 = vmatprep.subr.mxu0 0.0
    %192 = vmatpush1.xpose.msra.mxu0 0.0
    %193 = vmatprep.subr.mxu0 0.0
    %194 = vmatpush1.xpose.msra.mxu0 0.0
    %195 = vmatprep.subr.mxu0 0.0
    %196 = vmatpush1.xpose.msra.mxu0 0.0
    %197 = vmatprep.subr.mxu0 0.0
    %198 = vmatpush1.xpose.msra.mxu0 0.0
    %199 = vmatprep.subr.mxu0 0.0
    %200 = vmatpush1.xpose.msra.mxu0 0.0
    %201 = vmatprep.subr.mxu0 0.0
    %202 = vmatpush1.xpose.msra.mxu0 0.0
    %203 = vmatprep.subr.mxu0 0.0
    %204 = vmatpush1.xpose.msra.mxu0 0.0
    %205 = vmatprep.subr.mxu0 0.0
    %206 = vmatpush1.xpose.msra.mxu0 0.0
    %207 = vmatprep.subr.mxu0 0.0
    %208 = vmatpush1.xpose.msra.mxu0 0.0
    %209 = vmatprep.subr.mxu0 0.0
    %210 = vmatpush1.xpose.msra.mxu0 0.0
    %211 = vmatprep.subr.mxu0 0.0
    %212 = vmatpush1.xpose.msra.mxu0 0.0
    %213 = vmatprep.subr.mxu0 0.0
    %214 = vmatpush1.xpose.msra.mxu0 0.0
    %215 = vmatprep.subr.mxu0 0.0
    %216 = vmatpush1.xpose.msra.mxu0 0.0
    %217 = vmatprep.subr.mxu0 0.0
    %218 = vmatpush1.xpose.msra.mxu0 0.0
    %219 = vmatprep.subr.mxu0 0.0
    %220 = vmatpush1.xpose.msra.mxu0 0.0
    %221 = vmatprep.subr.mxu0 0.0
    %222 = vmatpush1.xpose.msra.mxu0 0.0
    %223 = vmatprep.subr.mxu0 0.0
    %224 = vmatpush1.xpose.msra.mxu0 0.0
    %225 = vmatprep.subr.mxu0 0.0
    %226 = vmatpush1.xpose.msra.mxu0 0.0
    %227 = vmatprep.subr.mxu0 0.0
    %228 = vmatpush1.xpose.msra.mxu0 0.0
    %229 = vmatprep.mubr.f32.mxu0 0.0
    %230 = vmatmul.mubr.f32.gmra.mrb[0].mxu0 %v160
    %v231 = vpop.f32.mrb[0].mxu0
    %v232 = vadd.f32 0.0, %v231
    %v233 = vpop.f32.mrb[0].mxu0
    %234 = vdwg.mxu0
    %v236 = vsel %vm82, %v71, 0
    %v239 = vsel %vm82, %v75, 0
    %241 = vmatprep.subr.mxu0 0.0
    %242 = vmatpush1.xpose.msra.mxu0 %v239
    %243 = vmatprep.subr.mxu0 0.0
    %244 = vmatpush1.xpose.msra.mxu0 0.0
    %245 = vmatprep.subr.mxu0 0.0
    %246 = vmatpush1.xpose.msra.mxu0 0.0
    %247 = vmatprep.subr.mxu0 0.0
    %248 = vmatpush1.xpose.msra.mxu0 0.0
    %249 = vmatprep.subr.mxu0 0.0
    %250 = vmatpush1.xpose.msra.mxu0 0.0
    %251 = vmatprep.subr.mxu0 0.0
    %252 = vmatpush1.xpose.msra.mxu0 0.0
    %253 = vmatprep.subr.mxu0 0.0
    %254 = vmatpush1.xpose.msra.mxu0 0.0
    %255 = vmatprep.subr.mxu0 0.0
    %256 = vmatpush1.xpose.msra.mxu0 0.0
    %257 = vmatprep.subr.mxu0 0.0
    %258 = vmatpush1.xpose.msra.mxu0 0.0
    %259 = vmatprep.subr.mxu0 0.0
    %260 = vmatpush1.xpose.msra.mxu0 0.0
    %261 = vmatprep.subr.mxu0 0.0
    %262 = vmatpush1.xpose.msra.mxu0 0.0
    %263 = vmatprep.subr.mxu0 0.0
    %264 = vmatpush1.xpose.msra.mxu0 0.0
    %265 = vmatprep.subr.mxu0 0.0
    %266 = vmatpush1.xpose.msra.mxu0 0.0
    %267 = vmatprep.subr.mxu0 0.0
    %268 = vmatpush1.xpose.msra.mxu0 0.0
    %269 = vmatprep.subr.mxu0 0.0
    %270 = vmatpush1.xpose.msra.mxu0 0.0
    %271 = vmatprep.subr.mxu0 0.0
    %272 = vmatpush1.xpose.msra.mxu0 0.0
    %273 = vmatprep.subr.mxu0 0.0
    %274 = vmatpush1.xpose.msra.mxu0 0.0
    %275 = vmatprep.subr.mxu0 0.0
    %276 = vmatpush1.xpose.msra.mxu0 0.0
    %277 = vmatprep.subr.mxu0 0.0
    %278 = vmatpush1.xpose.msra.mxu0 0.0
    %279 = vmatprep.subr.mxu0 0.0
    %280 = vmatpush1.xpose.msra.mxu0 0.0
    %281 = vmatprep.subr.mxu0 0.0
    %282 = vmatpush1.xpose.msra.mxu0 0.0
    %283 = vmatprep.subr.mxu0 0.0
    %284 = vmatpush1.xpose.msra.mxu0 0.0
    %285 = vmatprep.subr.mxu0 0.0
    %286 = vmatpush1.xpose.msra.mxu0 0.0
    %287 = vmatprep.subr.mxu0 0.0
    %288 = vmatpush1.xpose.msra.mxu0 0.0
    %289 = vmatprep.subr.mxu0 0.0
    %290 = vmatpush1.xpose.msra.mxu0 0.0
    %291 = vmatprep.subr.mxu0 0.0
    %292 = vmatpush1.xpose.msra.mxu0 0.0
    %293 = vmatprep.subr.mxu0 0.0
    %294 = vmatpush1.xpose.msra.mxu0 0.0
    %295 = vmatprep.subr.mxu0 0.0
    %296 = vmatpush1.xpose.msra.mxu0 0.0
    %297 = vmatprep.subr.mxu0 0.0
    %298 = vmatpush1.xpose.msra.mxu0 0.0
    %299 = vmatprep.subr.mxu0 0.0
    %300 = vmatpush1.xpose.msra.mxu0 0.0
    %301 = vmatprep.subr.mxu0 0.0
    %302 = vmatpush1.xpose.msra.mxu0 0.0
    %303 = vmatprep.subr.mxu0 0.0
    %304 = vmatpush1.xpose.msra.mxu0 0.0
    %305 = vmatprep.mubr.f32.mxu0 0.0
    %306 = vmatmul.mubr.f32.gmra.mrb[0].mxu0 %v236
    %v307 = vpop.f32.mrb[0].mxu0
    %v308 = vadd.f32 0.0, %v307
    %v309 = vpop.f32.mrb[0].mxu0
    %310 = vdwg.mxu0
    %v312 = vsel %vm82, %v72, 0
    %v315 = vsel %vm82, %v76, 0
    %317 = vmatprep.subr.mxu0 0.0
    %318 = vmatpush1.xpose.msra.mxu0 %v315
    %319 = vmatprep.subr.mxu0 0.0
    %320 = vmatpush1.xpose.msra.mxu0 0.0
    %321 = vmatprep.subr.mxu0 0.0
    %322 = vmatpush1.xpose.msra.mxu0 0.0
    %323 = vmatprep.subr.mxu0 0.0
    %324 = vmatpush1.xpose.msra.mxu0 0.0
    %325 = vmatprep.subr.mxu0 0.0
    %326 = vmatpush1.xpose.msra.mxu0 0.0
    %327 = vmatprep.subr.mxu0 0.0
    %328 = vmatpush1.xpose.msra.mxu0 0.0
    %329 = vmatprep.subr.mxu0 0.0
    %330 = vmatpush1.xpose.msra.mxu0 0.0
    %331 = vmatprep.subr.mxu0 0.0
    %332 = vmatpush1.xpose.msra.mxu0 0.0
    %333 = vmatprep.subr.mxu0 0.0
    %334 = vmatpush1.xpose.msra.mxu0 0.0
    %335 = vmatprep.subr.mxu0 0.0
    %336 = vmatpush1.xpose.msra.mxu0 0.0
    %337 = vmatprep.subr.mxu0 0.0
    %338 = vmatpush1.xpose.msra.mxu0 0.0
    %339 = vmatprep.subr.mxu0 0.0
    %340 = vmatpush1.xpose.msra.mxu0 0.0
    %341 = vmatprep.subr.mxu0 0.0
    %342 = vmatpush1.xpose.msra.mxu0 0.0
    %343 = vmatprep.subr.mxu0 0.0
    %344 = vmatpush1.xpose.msra.mxu0 0.0
    %345 = vmatprep.subr.mxu0 0.0
    %346 = vmatpush1.xpose.msra.mxu0 0.0
    %347 = vmatprep.subr.mxu0 0.0
    %348 = vmatpush1.xpose.msra.mxu0 0.0
    %349 = vmatprep.subr.mxu0 0.0
    %350 = vmatpush1.xpose.msra.mxu0 0.0
    %351 = vmatprep.subr.mxu0 0.0
    %352 = vmatpush1.xpose.msra.mxu0 0.0
    %353 = vmatprep.subr.mxu0 0.0
    %354 = vmatpush1.xpose.msra.mxu0 0.0
    %355 = vmatprep.subr.mxu0 0.0
    %356 = vmatpush1.xpose.msra.mxu0 0.0
    %357 = vmatprep.subr.mxu0 0.0
    %358 = vmatpush1.xpose.msra.mxu0 0.0
    %359 = vmatprep.subr.mxu0 0.0
    %360 = vmatpush1.xpose.msra.mxu0 0.0
    %361 = vmatprep.subr.mxu0 0.0
    %362 = vmatpush1.xpose.msra.mxu0 0.0
    %363 = vmatprep.subr.mxu0 0.0
    %364 = vmatpush1.xpose.msra.mxu0 0.0
    %365 = vmatprep.subr.mxu0 0.0
    %366 = vmatpush1.xpose.msra.mxu0 0.0
    %367 = vmatprep.subr.mxu0 0.0
    %368 = vmatpush1.xpose.msra.mxu0 0.0
    %369 = vmatprep.subr.mxu0 0.0
    %370 = vmatpush1.xpose.msra.mxu0 0.0
    %371 = vmatprep.subr.mxu0 0.0
    %372 = vmatpush1.xpose.msra.mxu0 0.0
    %373 = vmatprep.subr.mxu0 0.0
    %374 = vmatpush1.xpose.msra.mxu0 0.0
    %375 = vmatprep.subr.mxu0 0.0
    %376 = vmatpush1.xpose.msra.mxu0 0.0
    %377 = vmatprep.subr.mxu0 0.0
    %378 = vmatpush1.xpose.msra.mxu0 0.0
    %379 = vmatprep.subr.mxu0 0.0
    %380 = vmatpush1.xpose.msra.mxu0 0.0
    %381 = vmatprep.mubr.f32.mxu0 0.0
    %382 = vmatmul.mubr.f32.gmra.mrb[0].mxu0 %v312
    %v383 = vpop.f32.mrb[0].mxu0
    %v384 = vadd.f32 0.0, %v383
    %v385 = vpop.f32.mrb[0].mxu0
    %386 = vdwg.mxu0
    %vm387 = vcmp.gt.f32.partialorder %v81, 0.0
    %v388 = vsel %vm387, 1, 0
    %vm389 = vcmp.eq.s32.totalorder %v388, 1
    %v390 = vsel %vm389, -inf, %v156
    %v391 = vsel %vm389, -inf, %v232
    %v392 = vsel %vm389, -inf, %v308
    %v393 = vsel %vm389, -inf, %v384
    %v394 = vld [vmem:[%s4] sm:$0xff]
    %v395 = vld [vmem:[%s4 + $0x8] sm:$0xff]
    %v396 = vld [vmem:[%s4 + $0x10] sm:$0xff]
    %v397 = vld [vmem:[%s4 + $0x18] sm:$0xff]
    %v398 = vmul.f32 %v394, 5.0
    %v399 = vmul.f32 %v395, 5.0
    %v400 = vmul.f32 %v396, 5.0
    %v401 = vmul.f32 %v397, 5.0
    %v402 = vxor.u32 %v398, 2147483648
    %v403 = vxor.u32 %v399, 2147483648
    %v404 = vxor.u32 %v400, 2147483648
    %v405 = vxor.u32 %v401, 2147483648
    %v406 = vmul.f32 %v402, 1.442695
    %v407 = vpow.pop %v406
    %v408 = vmul.f32 %v403, 1.442695
    %v409 = vpow.pop %v408
    %v410 = vmul.f32 %v404, 1.442695
    %v411 = vpow.pop %v410
    %v412 = vmul.f32 %v405, 1.442695
    %v413 = vpow.pop %v412
    %v414 = vadd.f32 %v407, 1.0
    %v415 = vadd.f32 %v409, 1.0
    %v416 = vadd.f32 %v411, 1.0
    %v417 = vadd.f32 %v413, 1.0
    %v418 = vrcp.pop %v414
    %v419 = vmul.f32 1.0, %v418
    %v420 = vrcp.pop %v415
    %v421 = vmul.f32 1.0, %v420
    %v422 = vrcp.pop %v416
    %v423 = vmul.f32 1.0, %v422
    %v424 = vrcp.pop %v417
    %v425 = vmul.f32 1.0, %v424
    %v426 = vadd.f32 %v419, 1e-05
    %v427 = vadd.f32 %v421, 1e-05
    %v428 = vadd.f32 %v423, 1e-05
    %v429 = vadd.f32 %v425, 1e-05
    %v430 = vmul.f32 %v426, 1.0986123
    %v431 = vmul.f32 %v427, 1.0986123
    %v432 = vmul.f32 %v428, 1.0986123
    %v433 = vmul.f32 %v429, 1.0986123
    %v434 = vmul.f32 %v430, 1.442695
    %v435 = vpow.pop %v434
    %v436 = vmul.f32 %v431, 1.442695
    %v437 = vpow.pop %v436
    %v438 = vmul.f32 %v432, 1.442695
    %v439 = vpow.pop %v438
    %v440 = vmul.f32 %v433, 1.442695
    %v441 = vpow.pop %v440
    %v442 = vsub.f32 %v435, 1.0
    %v443 = vsub.f32 %v437, 1.0
    %v444 = vsub.f32 %v439, 1.0
    %v445 = vsub.f32 %v441, 1.0
    %v446 = vrcp.pop %v442
    %v447 = vrcp.pop %v443
    %v448 = vrcp.pop %v444
    %v449 = vrcp.pop %v445
    %v450 = vmul.f32 %v81, %v81
    %v451 = vmul.f32 %v450, -0.5
    %v452 = vmul.f32 %v446, 0.3989423
    %v453 = vmul.f32 %v447, 0.3989423
    %v454 = vmul.f32 %v448, 0.3989423
    %v455 = vmul.f32 %v449, 0.3989423
    %v456 = vmul.f32 %v446, %v446
    %v457 = vmul.f32 %v447, %v447
    %v458 = vmul.f32 %v448, %v448
    %v459 = vmul.f32 %v449, %v449
    %461 = vset.pattern.permute.xlu0 0
    %462 = vperm.xlu0 %461, %v456
    %v463 = vpop.permute.xlu0 %462
    %466 = vset.pattern.permute.xlu0 0
    %467 = vperm.xlu0 %466, %v457
    %v468 = vpop.permute.xlu0 %467
    %471 = vset.pattern.permute.xlu0 0
    %472 = vperm.xlu0 %471, %v458
    %v473 = vpop.permute.xlu0 %472
    %476 = vset.pattern.permute.xlu0 0
    %477 = vperm.xlu0 %476, %v459
    %v478 = vpop.permute.xlu0 %477
    %v480 = vmul.f32 %v451, %v463
    %v481 = vmul.f32 %v451, %v468
    %v482 = vmul.f32 %v451, %v473
    %v483 = vmul.f32 %v451, %v478
    %v484 = vmul.f32 %v480, 1.442695
    %v485 = vpow.pop %v484
    %v486 = vmul.f32 %v481, 1.442695
    %v487 = vpow.pop %v486
    %v488 = vmul.f32 %v482, 1.442695
    %v489 = vpow.pop %v488
    %v490 = vmul.f32 %v483, 1.442695
    %v491 = vpow.pop %v490
    %493 = vset.pattern.permute.xlu0 0
    %494 = vperm.xlu0 %493, %v452
    %v495 = vpop.permute.xlu0 %494
    %498 = vset.pattern.permute.xlu0 0
    %499 = vperm.xlu0 %498, %v453
    %v500 = vpop.permute.xlu0 %499
    %503 = vset.pattern.permute.xlu0 0
    %504 = vperm.xlu0 %503, %v454
    %v505 = vpop.permute.xlu0 %504
    %508 = vset.pattern.permute.xlu0 0
    %509 = vperm.xlu0 %508, %v455
    %v510 = vpop.permute.xlu0 %509
    %v512 = vmul.f32 %v495, %v485
    %v513 = vmul.f32 %v500, %v487
    %v514 = vmul.f32 %v505, %v489
    %v515 = vmul.f32 %v510, %v491
    %vm516 = vcmask 64512
    %517 = vst.msk [vmem:[#allocation11] sm:$0xff] %vm516, %v512
    %518 = vst.msk [vmem:[#allocation11 + $0x8] sm:$0xff] %vm516, %v513
    %519 = vst.msk [vmem:[#allocation11 + $0x10] sm:$0xff] %vm516, %v514
    %520 = vst.msk [vmem:[#allocation11 + $0x18] sm:$0xff] %vm516, %v515
    %vm521 = vcmask 7168
    %522 = vst.msk [vmem:[%s8] sm:$0xff] %vm521, %v442
    %523 = vst.msk [vmem:[%s8 + $0x8] sm:$0xff] %vm521, %v443
    %524 = vst.msk [vmem:[%s8 + $0x10] sm:$0xff] %vm521, %v444
    %525 = vst.msk [vmem:[%s8 + $0x18] sm:$0xff] %vm521, %v445
    %v526 = vsel %vm516, %v390, -inf
    %527 = vmax.xlane.f32.xlu0 %v526
    %v528 = vpop.xlane.xlu0 %527
    %v529 = vsel %vm516, %v391, -inf
    %530 = vmax.xlane.f32.xlu0 %v529
    %v531 = vpop.xlane.xlu0 %530
    %v532 = vsel %vm516, %v392, -inf
    %533 = vmax.xlane.f32.xlu0 %v532
    %v534 = vpop.xlane.xlu0 %533
    %v535 = vsel %vm516, %v393, -inf
    %536 = vmax.xlane.f32.xlu0 %v535
    %v537 = vpop.xlane.xlu0 %536
    %v538 = vsub.f32 %v390, %v528
    %v539 = vsub.f32 %v391, %v531
    %v540 = vsub.f32 %v392, %v534
    %v541 = vsub.f32 %v393, %v537
    %v542 = vmul.f32 %v538, 1.442695
    %v543 = vpow.pop %v542
    %v544 = vmul.f32 %v539, 1.442695
    %v545 = vpow.pop %v544
    %v546 = vmul.f32 %v540, 1.442695
    %v547 = vpow.pop %v546
    %v548 = vmul.f32 %v541, 1.442695
    %v549 = vpow.pop %v548
    %v550 = vsel %vm516, %v543, 0.0
    %551 = vadd.xlane.f32.xlu0 %v550
    %v552 = vpop.xlane.xlu0 %551
    %v553 = vsel %vm516, %v545, 0.0
    %554 = vadd.xlane.f32.xlu0 %v553
    %v555 = vpop.xlane.xlu0 %554
    %v556 = vsel %vm516, %v547, 0.0
    %557 = vadd.xlane.f32.xlu0 %v556
    %v558 = vpop.xlane.xlu0 %557
    %v559 = vsel %vm516, %v549, 0.0
    %560 = vadd.xlane.f32.xlu0 %v559
    %v561 = vpop.xlane.xlu0 %560
    %v562 = vrcp.pop %v552
    %v563 = vrcp.pop %v555
    %v564 = vrcp.pop %v558
    %v565 = vrcp.pop %v561
    %v566 = vmul.f32 %v543, %v562
    %v567 = vmul.f32 %v545, %v563
    %v568 = vmul.f32 %v547, %v564
    %v569 = vmul.f32 %v549, %v565
    %570 = vst.msk [vmem:[#allocation9] sm:$0xff] %vm516, %v566
    %571 = vst.msk [vmem:[#allocation9 + $0x8] sm:$0xff] %vm516, %v567
    %572 = vst.msk [vmem:[#allocation9 + $0x10] sm:$0xff] %vm516, %v568
    %573 = vst.msk [vmem:[#allocation9 + $0x18] sm:$0xff] %vm516, %v569
    %v575 = vsel %vm516, %v566, 0
    %577 = vmatprep.subr.mxu0 0.0
    %578 = vmatpush1.msra.mxu0 %v77
    %579 = vmatprep.subr.mxu0 0.0
    %580 = vmatpush1.msra.mxu0 0.0
    %581 = vmatprep.subr.mxu0 0.0
    %582 = vmatpush1.msra.mxu0 0.0
    %583 = vmatprep.subr.mxu0 0.0
    %584 = vmatpush1.msra.mxu0 0.0
    %585 = vmatprep.subr.mxu0 0.0
    %586 = vmatpush1.msra.mxu0 0.0
    %587 = vmatprep.subr.mxu0 0.0
    %588 = vmatpush1.msra.mxu0 0.0
    %589 = vmatprep.subr.mxu0 0.0
    %590 = vmatpush1.msra.mxu0 0.0
    %591 = vmatprep.subr.mxu0 0.0
    %592 = vmatpush1.msra.mxu0 0.0
    %593 = vmatprep.subr.mxu0 0.0
    %594 = vmatpush1.msra.mxu0 0.0
    %595 = vmatprep.subr.mxu0 0.0
    %596 = vmatpush1.msra.mxu0 0.0
    %597 = vmatprep.subr.mxu0 0.0
    %598 = vmatpush1.msra.mxu0 0.0
    %599 = vmatprep.subr.mxu0 0.0
    %600 = vmatpush1.msra.mxu0 0.0
    %601 = vmatprep.subr.mxu0 0.0
    %602 = vmatpush1.msra.mxu0 0.0
    %603 = vmatprep.subr.mxu0 0.0
    %604 = vmatpush1.msra.mxu0 0.0
    %605 = vmatprep.subr.mxu0 0.0
    %606 = vmatpush1.msra.mxu0 0.0
    %607 = vmatprep.subr.mxu0 0.0
    %608 = vmatpush1.msra.mxu0 0.0
    %609 = vmatprep.subr.mxu0 0.0
    %610 = vmatpush1.msra.mxu0 0.0
    %611 = vmatprep.subr.mxu0 0.0
    %612 = vmatpush1.msra.mxu0 0.0
    %613 = vmatprep.subr.mxu0 0.0
    %614 = vmatpush1.msra.mxu0 0.0
    %615 = vmatprep.subr.mxu0 0.0
    %616 = vmatpush1.msra.mxu0 0.0
    %617 = vmatprep.subr.mxu0 0.0
    %618 = vmatpush1.msra.mxu0 0.0
    %619 = vmatprep.subr.mxu0 0.0
    %620 = vmatpush1.msra.mxu0 0.0
    %621 = vmatprep.subr.mxu0 0.0
    %622 = vmatpush1.msra.mxu0 0.0
    %623 = vmatprep.subr.mxu0 0.0
    %624 = vmatpush1.msra.mxu0 0.0
    %625 = vmatprep.subr.mxu0 0.0
    %626 = vmatpush1.msra.mxu0 0.0
    %627 = vmatprep.subr.mxu0 0.0
    %628 = vmatpush1.msra.mxu0 0.0
    %629 = vmatprep.subr.mxu0 0.0
    %630 = vmatpush1.msra.mxu0 0.0
    %631 = vmatprep.subr.mxu0 0.0
    %632 = vmatpush1.msra.mxu0 0.0
    %633 = vmatprep.subr.mxu0 0.0
    %634 = vmatpush1.msra.mxu0 0.0
    %635 = vmatprep.subr.mxu0 0.0
    %636 = vmatpush1.msra.mxu0 0.0
    %637 = vmatprep.subr.mxu0 0.0
    %638 = vmatpush1.msra.mxu0 0.0
    %639 = vmatprep.subr.mxu0 0.0
    %640 = vmatpush1.msra.mxu0 0.0
    %641 = vmatprep.mubr.f32.mxu0 0.0
    %642 = vmatmul.mubr.f32.gmra.mrb[0].mxu0 %v575
    %v643 = vpop.f32.mrb[0].mxu0
    %v644 = vadd.f32 0.0, %v643
    %v645 = vpop.f32.mrb[0].mxu0
    %646 = vdwg.mxu0
    %v648 = vsel %vm516, %v567, 0
    %650 = vmatprep.subr.mxu0 0.0
    %651 = vmatpush1.msra.mxu0 %v78
    %652 = vmatprep.subr.mxu0 0.0
    %653 = vmatpush1.msra.mxu0 0.0
    %654 = vmatprep.subr.mxu0 0.0
    %655 = vmatpush1.msra.mxu0 0.0
    %656 = vmatprep.subr.mxu0 0.0
    %657 = vmatpush1.msra.mxu0 0.0
    %658 = vmatprep.subr.mxu0 0.0
    %659 = vmatpush1.msra.mxu0 0.0
    %660 = vmatprep.subr.mxu0 0.0
    %661 = vmatpush1.msra.mxu0 0.0
    %662 = vmatprep.subr.mxu0 0.0
    %663 = vmatpush1.msra.mxu0 0.0
    %664 = vmatprep.subr.mxu0 0.0
    %665 = vmatpush1.msra.mxu0 0.0
    %666 = vmatprep.subr.mxu0 0.0
    %667 = vmatpush1.msra.mxu0 0.0
    %668 = vmatprep.subr.mxu0 0.0
    %669 = vmatpush1.msra.mxu0 0.0
    %670 = vmatprep.subr.mxu0 0.0
    %671 = vmatpush1.msra.mxu0 0.0
    %672 = vmatprep.subr.mxu0 0.0
    %673 = vmatpush1.msra.mxu0 0.0
    %674 = vmatprep.subr.mxu0 0.0
    %675 = vmatpush1.msra.mxu0 0.0
    %676 = vmatprep.subr.mxu0 0.0
    %677 = vmatpush1.msra.mxu0 0.0
    %678 = vmatprep.subr.mxu0 0.0
    %679 = vmatpush1.msra.mxu0 0.0
    %680 = vmatprep.subr.mxu0 0.0
    %681 = vmatpush1.msra.mxu0 0.0
    %682 = vmatprep.subr.mxu0 0.0
    %683 = vmatpush1.msra.mxu0 0.0
    %684 = vmatprep.subr.mxu0 0.0
    %685 = vmatpush1.msra.mxu0 0.0
    %686 = vmatprep.subr.mxu0 0.0
    %687 = vmatpush1.msra.mxu0 0.0
    %688 = vmatprep.subr.mxu0 0.0
    %689 = vmatpush1.msra.mxu0 0.0
    %690 = vmatprep.subr.mxu0 0.0
    %691 = vmatpush1.msra.mxu0 0.0
    %692 = vmatprep.subr.mxu0 0.0
    %693 = vmatpush1.msra.mxu0 0.0
    %694 = vmatprep.subr.mxu0 0.0
    %695 = vmatpush1.msra.mxu0 0.0
    %696 = vmatprep.subr.mxu0 0.0
    %697 = vmatpush1.msra.mxu0 0.0
    %698 = vmatprep.subr.mxu0 0.0
    %699 = vmatpush1.msra.mxu0 0.0
    %700 = vmatprep.subr.mxu0 0.0
    %701 = vmatpush1.msra.mxu0 0.0
    %702 = vmatprep.subr.mxu0 0.0
    %703 = vmatpush1.msra.mxu0 0.0
    %704 = vmatprep.subr.mxu0 0.0
    %705 = vmatpush1.msra.mxu0 0.0
    %706 = vmatprep.subr.mxu0 0.0
    %707 = vmatpush1.msra.mxu0 0.0
    %708 = vmatprep.subr.mxu0 0.0
    %709 = vmatpush1.msra.mxu0 0.0
    %710 = vmatprep.subr.mxu0 0.0
    %711 = vmatpush1.msra.mxu0 0.0
    %712 = vmatprep.subr.mxu0 0.0
    %713 = vmatpush1.msra.mxu0 0.0
    %714 = vmatprep.mubr.f32.mxu0 0.0
    %715 = vmatmul.mubr.f32.gmra.mrb[0].mxu0 %v648
    %v716 = vpop.f32.mrb[0].mxu0
    %v717 = vadd.f32 0.0, %v716
    %v718 = vpop.f32.mrb[0].mxu0
    %719 = vdwg.mxu0
    %v721 = vsel %vm516, %v568, 0
    %723 = vmatprep.subr.mxu0 0.0
    %724 = vmatpush1.msra.mxu0 %v79
    %725 = vmatprep.subr.mxu0 0.0
    %726 = vmatpush1.msra.mxu0 0.0
    %727 = vmatprep.subr.mxu0 0.0
    %728 = vmatpush1.msra.mxu0 0.0
    %729 = vmatprep.subr.mxu0 0.0
    %730 = vmatpush1.msra.mxu0 0.0
    %731 = vmatprep.subr.mxu0 0.0
    %732 = vmatpush1.msra.mxu0 0.0
    %733 = vmatprep.subr.mxu0 0.0
    %734 = vmatpush1.msra.mxu0 0.0
    %735 = vmatprep.subr.mxu0 0.0
    %736 = vmatpush1.msra.mxu0 0.0
    %737 = vmatprep.subr.mxu0 0.0
    %738 = vmatpush1.msra.mxu0 0.0
    %739 = vmatprep.subr.mxu0 0.0
    %740 = vmatpush1.msra.mxu0 0.0
    %741 = vmatprep.subr.mxu0 0.0
    %742 = vmatpush1.msra.mxu0 0.0
    %743 = vmatprep.subr.mxu0 0.0
    %744 = vmatpush1.msra.mxu0 0.0
    %745 = vmatprep.subr.mxu0 0.0
    %746 = vmatpush1.msra.mxu0 0.0
    %747 = vmatprep.subr.mxu0 0.0
    %748 = vmatpush1.msra.mxu0 0.0
    %749 = vmatprep.subr.mxu0 0.0
    %750 = vmatpush1.msra.mxu0 0.0
    %751 = vmatprep.subr.mxu0 0.0
    %752 = vmatpush1.msra.mxu0 0.0
    %753 = vmatprep.subr.mxu0 0.0
    %754 = vmatpush1.msra.mxu0 0.0
    %755 = vmatprep.subr.mxu0 0.0
    %756 = vmatpush1.msra.mxu0 0.0
    %757 = vmatprep.subr.mxu0 0.0
    %758 = vmatpush1.msra.mxu0 0.0
    %759 = vmatprep.subr.mxu0 0.0
    %760 = vmatpush1.msra.mxu0 0.0
    %761 = vmatprep.subr.mxu0 0.0
    %762 = vmatpush1.msra.mxu0 0.0
    %763 = vmatprep.subr.mxu0 0.0
    %764 = vmatpush1.msra.mxu0 0.0
    %765 = vmatprep.subr.mxu0 0.0
    %766 = vmatpush1.msra.mxu0 0.0
    %767 = vmatprep.subr.mxu0 0.0
    %768 = vmatpush1.msra.mxu0 0.0
    %769 = vmatprep.subr.mxu0 0.0
    %770 = vmatpush1.msra.mxu0 0.0
    %771 = vmatprep.subr.mxu0 0.0
    %772 = vmatpush1.msra.mxu0 0.0
    %773 = vmatprep.subr.mxu0 0.0
    %774 = vmatpush1.msra.mxu0 0.0
    %775 = vmatprep.subr.mxu0 0.0
    %776 = vmatpush1.msra.mxu0 0.0
    %777 = vmatprep.subr.mxu0 0.0
    %778 = vmatpush1.msra.mxu0 0.0
    %779 = vmatprep.subr.mxu0 0.0
    %780 = vmatpush1.msra.mxu0 0.0
    %781 = vmatprep.subr.mxu0 0.0
    %782 = vmatpush1.msra.mxu0 0.0
    %783 = vmatprep.subr.mxu0 0.0
    %784 = vmatpush1.msra.mxu0 0.0
    %785 = vmatprep.subr.mxu0 0.0
    %786 = vmatpush1.msra.mxu0 0.0
    %787 = vmatprep.mubr.f32.mxu0 0.0
    %788 = vmatmul.mubr.f32.gmra.mrb[0].mxu0 %v721
    %v789 = vpop.f32.mrb[0].mxu0
    %v790 = vadd.f32 0.0, %v789
    %v791 = vpop.f32.mrb[0].mxu0
    %792 = vdwg.mxu0
    %v794 = vsel %vm516, %v569, 0
    %796 = vmatprep.subr.mxu0 0.0
    %797 = vmatpush1.msra.mxu0 %v80
    %798 = vmatprep.subr.mxu0 0.0
    %799 = vmatpush1.msra.mxu0 0.0
    %800 = vmatprep.subr.mxu0 0.0
    %801 = vmatpush1.msra.mxu0 0.0
    %802 = vmatprep.subr.mxu0 0.0
    %803 = vmatpush1.msra.mxu0 0.0
    %804 = vmatprep.subr.mxu0 0.0
    %805 = vmatpush1.msra.mxu0 0.0
    %806 = vmatprep.subr.mxu0 0.0
    %807 = vmatpush1.msra.mxu0 0.0
    %808 = vmatprep.subr.mxu0 0.0
    %809 = vmatpush1.msra.mxu0 0.0
    %810 = vmatprep.subr.mxu0 0.0
    %811 = vmatpush1.msra.mxu0 0.0
    %812 = vmatprep.subr.mxu0 0.0
    %813 = vmatpush1.msra.mxu0 0.0
    %814 = vmatprep.subr.mxu0 0.0
    %815 = vmatpush1.msra.mxu0 0.0
    %816 = vmatprep.subr.mxu0 0.0
    %817 = vmatpush1.msra.mxu0 0.0
    %818 = vmatprep.subr.mxu0 0.0
    %819 = vmatpush1.msra.mxu0 0.0
    %820 = vmatprep.subr.mxu0 0.0
    %821 = vmatpush1.msra.mxu0 0.0
    %822 = vmatprep.subr.mxu0 0.0
    %823 = vmatpush1.msra.mxu0 0.0
    %824 = vmatprep.subr.mxu0 0.0
    %825 = vmatpush1.msra.mxu0 0.0
    %826 = vmatprep.subr.mxu0 0.0
    %827 = vmatpush1.msra.mxu0 0.0
    %828 = vmatprep.subr.mxu0 0.0
    %829 = vmatpush1.msra.mxu0 0.0
    %830 = vmatprep.subr.mxu0 0.0
    %831 = vmatpush1.msra.mxu0 0.0
    %832 = vmatprep.subr.mxu0 0.0
    %833 = vmatpush1.msra.mxu0 0.0
    %834 = vmatprep.subr.mxu0 0.0
    %835 = vmatpush1.msra.mxu0 0.0
    %836 = vmatprep.subr.mxu0 0.0
    %837 = vmatpush1.msra.mxu0 0.0
    %838 = vmatprep.subr.mxu0 0.0
    %839 = vmatpush1.msra.mxu0 0.0
    %840 = vmatprep.subr.mxu0 0.0
    %841 = vmatpush1.msra.mxu0 0.0
    %842 = vmatprep.subr.mxu0 0.0
    %843 = vmatpush1.msra.mxu0 0.0
    %844 = vmatprep.subr.mxu0 0.0
    %845 = vmatpush1.msra.mxu0 0.0
    %846 = vmatprep.subr.mxu0 0.0
    %847 = vmatpush1.msra.mxu0 0.0
    %848 = vmatprep.subr.mxu0 0.0
    %849 = vmatpush1.msra.mxu0 0.0
    %850 = vmatprep.subr.mxu0 0.0
    %851 = vmatpush1.msra.mxu0 0.0
    %852 = vmatprep.subr.mxu0 0.0
    %853 = vmatpush1.msra.mxu0 0.0
    %854 = vmatprep.subr.mxu0 0.0
    %855 = vmatpush1.msra.mxu0 0.0
    %856 = vmatprep.subr.mxu0 0.0
    %857 = vmatpush1.msra.mxu0 0.0
    %858 = vmatprep.subr.mxu0 0.0
    %859 = vmatpush1.msra.mxu0 0.0
    %860 = vmatprep.mubr.f32.mxu0 0.0
    %861 = vmatmul.mubr.f32.gmra.mrb[0].mxu0 %v794
    %v862 = vpop.f32.mrb[0].mxu0
    %v863 = vadd.f32 0.0, %v862
    %v864 = vpop.f32.mrb[0].mxu0
    %865 = vdwg.mxu0
    %866 = vst.msk [vmem:[#allocation8] sm:$0xff] %vm82, %v644
    %867 = vst.msk [vmem:[#allocation8 + $0x8] sm:$0xff] %vm82, %v717
    %868 = vst.msk [vmem:[#allocation8 + $0x10] sm:$0xff] %vm82, %v790
    %869 = vst.msk [vmem:[#allocation8 + $0x18] sm:$0xff] %vm82, %v863
    // Predicated region
    $region34: #{tpu_custom_call.1} parent=1 // pred_check
      _
    $region35: #{tpu_custom_call.1} parent=1 // pred_check_branch
      %871 = sbr.rel (0) target = $region37
    $region36: #{tpu_custom_call.1} parent=1 // pred_region
      %s873 = ssub.s32 512, 512
      %874 = vsyncadd [#allocation4], %s873
      %s875 = sshll.u32 [#allocation8], 4
      %s876 = int_to_ptr.vmem [resolvable:$true] %s875
      %881 = dma.vmem_to_hbm [thread:$0]  %s876, 512, %s5, [#allocation4], 128, 128, 8
    $region37: #{tpu_custom_call.1} parent=1 // pred_fallthru
      _
    // Predicated region
    $region38: #{tpu_custom_call.1} parent=1 // pred_check
      _
    $region39: #{tpu_custom_call.1} parent=1 // pred_check_branch
      %883 = sbr.rel (0) target = $region41
    $region40: #{tpu_custom_call.1} parent=1 // pred_region
      %s885 = ssub.s32 512, 512
      %886 = vsyncadd [#allocation10], %s885
      %s887 = sshll.u32 [#allocation9], 4
      %s888 = int_to_ptr.vmem [resolvable:$true] %s887
      %893 = dma.vmem_to_hbm [thread:$0]  %s888, 512, %s6, [#allocation10], 128, 128, 8
    $region41: #{tpu_custom_call.1} parent=1 // pred_fallthru
      _
    // Predicated region
    $region42: #{tpu_custom_call.1} parent=1 // pred_check
      _
    $region43: #{tpu_custom_call.1} parent=1 // pred_check_branch
      %895 = sbr.rel (0) target = $region45
    $region44: #{tpu_custom_call.1} parent=1 // pred_region
      %s897 = ssub.s32 512, 512
      %898 = vsyncadd [#allocation10], %s897
      %s899 = sshll.u32 [#allocation11], 4
      %s900 = int_to_ptr.vmem [resolvable:$true] %s899
      %905 = dma.vmem_to_hbm [thread:$0]  %s900, 512, %s7, [#allocation10], 128, 128, 8
    $region45: #{tpu_custom_call.1} parent=1 // pred_fallthru
      _
    // Predicated region
    $region46: #{tpu_custom_call.1} parent=1 // pred_check
      _
    $region47: #{tpu_custom_call.1} parent=1 // pred_check_branch
      %907 = sbr.rel (0) target = $region49
    $region48: #{tpu_custom_call.1} parent=1 // pred_region
      _
    $region49: #{tpu_custom_call.1} parent=1 // pred_fallthru
      _
    // Predicated region
    $region50: #{tpu_custom_call.1} parent=1 // pred_check
      _
    $region51: #{tpu_custom_call.1} parent=1 // pred_check_branch
      %909 = sbr.rel (0) target = $region53
    $region52: #{tpu_custom_call.1} parent=1 // pred_region
      %910 = dma.done [#allocation4], 512
    $region53: #{tpu_custom_call.1} parent=1 // pred_fallthru
      _
    // Predicated region
    $region54: #{tpu_custom_call.1} parent=1 // pred_check
      _
    $region55: #{tpu_custom_call.1} parent=1 // pred_check_branch
      %912 = sbr.rel (0) target = $region57
    $region56: #{tpu_custom_call.1} parent=1 // pred_region
      %913 = dma.done [#allocation10], 512
    $region57: #{tpu_custom_call.1} parent=1 // pred_fallthru
      _
    // Predicated region
    $region58: #{tpu_custom_call.1} parent=1 // pred_check
      _
    $region59: #{tpu_custom_call.1} parent=1 // pred_check_branch
      %915 = sbr.rel (0) target = $region61
    $region60: #{tpu_custom_call.1} parent=1 // pred_region
      %916 = dma.done [#allocation10], 512
    $region61: #{tpu_custom_call.1} parent=1 // pred_fallthru
      _
    // Predicated region
    $region62: #{tpu_custom_call.1} parent=1 // pred_check
      _
    $region63: #{tpu_custom_call.1} parent=1 // pred_check_branch
      %918 = sbr.rel (0) target = $region65
    $region64: #{tpu_custom_call.1} parent=1 // pred_region
      _
    $region65: #{tpu_custom_call.1} parent=1 // pred_fallthru
      _
    %919 = vsyncpa [#allocation3], 1
    %920 = vsyncpa [#allocation6], 1
    %921 = vsyncpa [#allocation4], 1
    %922 = vsyncpa [#allocation10], 1

</llo_original>
